<compile_context>
chip_gen: v7x
topology: tpu7x:2x2x1
jax: 0.10.0
libtpu: 0.0.40
codegen_flags: <defaults>
</compile_context>

<pallas_src>
import jax
import jax.numpy as jnp
import numpy as np
from jax.experimental import pallas as pl
from jax.experimental.pallas import tpu as pltpu


def _round_up(x, m):
    return ((x + m - 1) // m) * m


def _cdiv(a, b):
    return -(-a // b)


def _choose_tiling(B, block_b):
    """Tile-count-first batch tiling (bounds padding waste to <8 rows/tile)."""
    n_tiles = max(1, _cdiv(B, max(block_b, 8)))
    # v7x: make sure the parallel grid has >= 2 steps so both TensorCores get
    # work (no-op on v5e/v6e which have a single TC).  Skip for tiny batches
    # where per-step overhead would dominate.
    if n_tiles == 1 and B >= 64:
        n_tiles = 2
    # Prefer an even step count so the two v7x TCs stay load-balanced.
    if n_tiles > 1 and n_tiles % 2 == 1:
        n_tiles += 1
    TB = _round_up(_cdiv(B, n_tiles), 8)   # sublane granule
    Bp = n_tiles * TB
    return TB, Bp, n_tiles


def critic_kernel(s_ref, a_ref,
                  w1_ref, b1_ref,
                  w2_ref, b2_ref,
                  w3_ref, b3_ref,
                  wq_ref, bq_ref,
                  q_ref,
                  x_scr):
    cdt = w1_ref.dtype                 # MXU operand dtype (bf16 or f32)
    sd = s_ref.shape[-1]

    # fc1: fuse the state/action concat into a single K=(state+action) MXU
    # pass by packing both tiles into a small VMEM scratch (masked lane-range
    # stores), instead of paying two separate MXU weight pushes.
    x_scr[:, :sd] = s_ref[...].astype(cdt)
    x_scr[:, sd:] = a_ref[...].astype(cdt)
    h = jnp.dot(x_scr[...], w1_ref[...],
                preferred_element_type=jnp.float32) + b1_ref[...]
    h = jnp.maximum(h, 0.0)

    h = jnp.dot(h.astype(cdt), w2_ref[...],
                preferred_element_type=jnp.float32) + b2_ref[...]
    h = jnp.maximum(h, 0.0)

    h = jnp.dot(h.astype(cdt), w3_ref[...],
                preferred_element_type=jnp.float32) + b3_ref[...]
    h = jnp.maximum(h, 0.0)

    # Final layer (hidden -> 1): f32 VPU multiply + lane reduce instead of an
    # N=1 MXU matmul; bias comes from SMEM as a scalar.
    q = jnp.sum(h * wq_ref[...], axis=-1, keepdims=True) + bq_ref[0]
    q_ref[...] = q.astype(q_ref.dtype)


def critic_forward(state, action, params, *, block_b=1024, use_bf16=True):
    """state: (B, state_dim) f32, action: (B, action_dim) f32.
    params: dict with w1,b1,w2,b2,w3,b3,wq,bq; weights stored as (in, out)."""
    B, state_dim = state.shape
    action_dim = action.shape[1]
    in_dim = state_dim + action_dim
    hidden = params["w2"].shape[0]

    TB, Bp, n_tiles = _choose_tiling(B, block_b)
    if Bp != B:
        pad = Bp - B
        state = jnp.pad(state, ((0, pad), (0, 0)))
        action = jnp.pad(action, ((0, pad), (0, 0)))

    # Matmul operands in bf16 (native MXU format), accumulation stays f32.
    cdt = jnp.bfloat16 if use_bf16 else jnp.float32
    w1 = params["w1"].astype(cdt)
    w2 = params["w2"].astype(cdt)
    w3 = params["w3"].astype(cdt)
    wq_row = params["wq"].reshape(1, hidden).astype(jnp.float32)   # VPU head stays f32
    bq = params["bq"].reshape(1).astype(jnp.float32)               # scalar -> SMEM

    def fixed(shape):
        # Whole-array block, same block index every grid step -> fetched once,
        # stays resident in VMEM across the batch tiles.
        return pl.BlockSpec(shape, lambda i: (0, 0))

    q = pl.pallas_call(
        critic_kernel,
        out_shape=jax.ShapeDtypeStruct((Bp, 1), jnp.float32),
        grid=(n_tiles,),
        in_specs=[
            pl.BlockSpec((TB, state_dim), lambda i: (i, 0)),
            pl.BlockSpec((TB, action_dim), lambda i: (i, 0)),
            fixed((in_dim, hidden)),
            fixed((1, hidden)),
            fixed((hidden, hidden)),
            fixed((1, hidden)),
            fixed((hidden, hidden)),
            fixed((1, hidden)),
            fixed((1, hidden)),
            pl.BlockSpec(memory_space=pltpu.MemorySpace.SMEM),   # bq scalar
        ],
        out_specs=pl.BlockSpec((TB, 1), lambda i: (i, 0)),
        scratch_shapes=[pltpu.VMEM((TB, in_dim), cdt)],
        compiler_params=pltpu.CompilerParams(
            dimension_semantics=("parallel",),
            vmem_limit_bytes=32 * 1024 * 1024),
    )(state, action,
      w1, params["b1"],
      w2, params["b2"],
      w3, params["b3"],
      wq_row, bq)

    return q[:B]


def xavier_uniform(key, fan_in, fan_out, dtype=jnp.float32):
    # matches torch.nn.init.xavier_uniform_ gain=1
    limit = float(np.sqrt(6.0 / (fan_in + fan_out)))
    return jax.random.uniform(key, (fan_in, fan_out), dtype=dtype,
                              minval=-limit, maxval=limit)


def init_critic_params(key, input_dim, hidden_dim=256):
    k1, k2, k3, k4 = jax.random.split(key, 4)
    return {
        "w1": xavier_uniform(k1, input_dim, hidden_dim),
        "b1": jnp.zeros((1, hidden_dim), jnp.float32),
        "w2": xavier_uniform(k2, hidden_dim, hidden_dim),
        "b2": jnp.zeros((1, hidden_dim), jnp.float32),
        "w3": xavier_uniform(k3, hidden_dim, hidden_dim),
        "b3": jnp.zeros((1, hidden_dim), jnp.float32),
        "wq": xavier_uniform(k4, hidden_dim, 1),
        "bq": jnp.zeros((1, 1), jnp.float32),
    }


def critic_reference(state, action, p):
    x = jnp.concatenate([state, action], axis=-1)
    h = jax.nn.relu(x @ p["w1"] + p["b1"])
    h = jax.nn.relu(h @ p["w2"] + p["b2"])
    h = jax.nn.relu(h @ p["w3"] + p["b3"])
    return h @ p["wq"] + p["bq"]


if __name__ == "__main__":
    key = jax.random.PRNGKey(0)
    k_param, k_state, k_action = jax.random.split(key, 3)

    batch = 8
    state_dim = 12
    action_dim = 4
    hidden_dim = 32          # multiple of 128/256 recommended for real runs
    input_dim = state_dim + action_dim

    params = init_critic_params(k_param, input_dim, hidden_dim)
    state = jax.random.normal(k_state, (batch, state_dim), jnp.float32)
    action = jax.random.normal(k_action, (batch, action_dim), jnp.float32)

    fwd = jax.jit(critic_forward, static_argnames=("block_b", "use_bf16"))
    q_ref = critic_reference(state, action, params)

    # Pure-f32 MXU path: must match the f32 reference tightly.
    q_f32 = jax.block_until_ready(fwd(state, action, params, use_bf16=False))
    assert q_f32.shape == (batch, 1), q_f32.shape
    np.testing.assert_allclose(np.asarray(q_f32), np.asarray(q_ref),
                               rtol=1e-5, atol=1e-5)

    # Default bf16-operand / f32-accumulation path: relaxed tolerance vs the
    # f32 reference (bf16 operand rounding, accumulation still f32).
    q_bf16 = jax.block_until_ready(fwd(state, action, params, use_bf16=True))
    assert q_bf16.shape == (batch, 1), q_bf16.shape
    np.testing.assert_allclose(np.asarray(q_bf16), np.asarray(q_ref),
                               rtol=2e-2, atol=2e-2)

    print("KERNEL_OK")
</pallas_src>

<mosaic_0001>
module attributes {stable_mosaic.version = 11 : i64} {
  func.func @critic_kernel(%arg0: i32, %arg1: memref<8x12xf32, #tpu.memory_space<vmem>>, %arg2: memref<8x4xf32, #tpu.memory_space<vmem>>, %arg3: memref<16x32xf32, #tpu.memory_space<vmem>>, %arg4: memref<1x32xf32, #tpu.memory_space<vmem>>, %arg5: memref<32x32xf32, #tpu.memory_space<vmem>>, %arg6: memref<1x32xf32, #tpu.memory_space<vmem>>, %arg7: memref<32x32xf32, #tpu.memory_space<vmem>>, %arg8: memref<1x32xf32, #tpu.memory_space<vmem>>, %arg9: memref<1x32xf32, #tpu.memory_space<vmem>>, %arg10: memref<1xf32, #tpu.memory_space<smem>>, %arg11: memref<8x1xf32, #tpu.memory_space<vmem>>, %arg12: memref<8x16xf32, #tpu.memory_space<vmem>>) attributes {dimension_semantics = [#tpu.dimension_semantics<parallel>], iteration_bounds = array<i64: 1>, scalar_prefetch = 0 : i64, scratch_operands = 1 : i64, tpu.core_type = #tpu.core_type<tc>, window_params = [{transform_indices = @transform_0, window_bounds = array<i64: 8, 12>}, {transform_indices = @transform_1, window_bounds = array<i64: 8, 4>}, {pipeline_mode = #tpu.pipeline_mode<synchronous>, transform_indices = @transform_2, window_bounds = array<i64: 16, 32>}, {pipeline_mode = #tpu.pipeline_mode<synchronous>, transform_indices = @transform_3, window_bounds = array<i64: 1, 32>}, {pipeline_mode = #tpu.pipeline_mode<synchronous>, transform_indices = @transform_4, window_bounds = array<i64: 32, 32>}, {pipeline_mode = #tpu.pipeline_mode<synchronous>, transform_indices = @transform_5, window_bounds = array<i64: 1, 32>}, {pipeline_mode = #tpu.pipeline_mode<synchronous>, transform_indices = @transform_6, window_bounds = array<i64: 32, 32>}, {pipeline_mode = #tpu.pipeline_mode<synchronous>, transform_indices = @transform_7, window_bounds = array<i64: 1, 32>}, {pipeline_mode = #tpu.pipeline_mode<synchronous>, transform_indices = @transform_8, window_bounds = array<i64: 1, 32>}, {transform_indices = @transform_9, window_bounds = array<i64: 1>}, {transform_indices = @transform_10, window_bounds = array<i64: 8, 1>}]} {
    %c0 = arith.constant 0 : index
    %c0_0 = arith.constant 0 : index
    %0 = vector.load %arg1[%c0, %c0_0] : memref<8x12xf32, #tpu.memory_space<vmem>>, vector<8x12xf32>
    %c0_1 = arith.constant 0 : index
    %c0_2 = arith.constant 0 : index
    %1 = vector.load %arg12[%c0_1, %c0_2] : memref<8x16xf32, #tpu.memory_space<vmem>>, vector<8x12xf32>
    tpu.vector_store %arg12[%c0_1, %c0_2], %0 {strides = array<i32>} : memref<8x16xf32, #tpu.memory_space<vmem>>, vector<8x12xf32>,
    %c0_3 = arith.constant 0 : index
    %c0_4 = arith.constant 0 : index
    %2 = vector.load %arg2[%c0_3, %c0_4] : memref<8x4xf32, #tpu.memory_space<vmem>>, vector<8x4xf32>
    %c0_5 = arith.constant 0 : index
    %c12 = arith.constant 12 : index
    %3 = vector.load %arg12[%c0_5, %c12] : memref<8x16xf32, #tpu.memory_space<vmem>>, vector<8x4xf32>
    tpu.vector_store %arg12[%c0_5, %c12], %2 {strides = array<i32>} : memref<8x16xf32, #tpu.memory_space<vmem>>, vector<8x4xf32>,
    %c0_6 = arith.constant 0 : index
    %c0_7 = arith.constant 0 : index
    %4 = vector.load %arg12[%c0_6, %c0_7] : memref<8x16xf32, #tpu.memory_space<vmem>>, vector<8x16xf32>
    %c0_8 = arith.constant 0 : index
    %c0_9 = arith.constant 0 : index
    %5 = vector.load %arg3[%c0_8, %c0_9] : memref<16x32xf32, #tpu.memory_space<vmem>>, vector<16x32xf32>
    %cst = arith.constant dense<0.000000e+00> : vector<8x32xf32>
    %6 = tpu.matmul %4, %5, %cst {dimension_numbers = #tpu.dot_dimension_numbers<[1], [0], [0], [1], [0, 0, 1, 1], [], []>} : vector<8x16xf32>, vector<16x32xf32>, vector<8x32xf32> -> vector<8x32xf32>
    %c0_10 = arith.constant 0 : index
    %c0_11 = arith.constant 0 : index
    %7 = vector.load %arg4[%c0_10, %c0_11] : memref<1x32xf32, #tpu.memory_space<vmem>>, vector<1x32xf32>
    %8 = vector.broadcast %7 : vector<1x32xf32> to vector<8x32xf32>
    %9 = arith.addf %6, %8 : vector<8x32xf32>
    %cst_12 = arith.constant 0.000000e+00 : f32
    %10 = vector.broadcast %cst_12 : f32 to vector<8x32xf32>
    %11 = arith.maximumf %9, %10 : vector<8x32xf32>
    %c0_13 = arith.constant 0 : index
    %c0_14 = arith.constant 0 : index
    %12 = vector.load %arg5[%c0_13, %c0_14] : memref<32x32xf32, #tpu.memory_space<vmem>>, vector<32x32xf32>
    %cst_15 = arith.constant dense<0.000000e+00> : vector<8x32xf32>
    %13 = tpu.matmul %11, %12, %cst_15 {dimension_numbers = #tpu.dot_dimension_numbers<[1], [0], [0], [1], [0, 0, 1, 1], [], []>} : vector<8x32xf32>, vector<32x32xf32>, vector<8x32xf32> -> vector<8x32xf32>
    %c0_16 = arith.constant 0 : index
    %c0_17 = arith.constant 0 : index
    %14 = vector.load %arg6[%c0_16, %c0_17] : memref<1x32xf32, #tpu.memory_space<vmem>>, vector<1x32xf32>
    %15 = vector.broadcast %14 : vector<1x32xf32> to vector<8x32xf32>
    %16 = arith.addf %13, %15 : vector<8x32xf32>
    %cst_18 = arith.constant 0.000000e+00 : f32
    %17 = vector.broadcast %cst_18 : f32 to vector<8x32xf32>
    %18 = arith.maximumf %16, %17 : vector<8x32xf32>
    %c0_19 = arith.constant 0 : index
    %c0_20 = arith.constant 0 : index
    %19 = vector.load %arg7[%c0_19, %c0_20] : memref<32x32xf32, #tpu.memory_space<vmem>>, vector<32x32xf32>
    %cst_21 = arith.constant dense<0.000000e+00> : vector<8x32xf32>
    %20 = tpu.matmul %18, %19, %cst_21 {dimension_numbers = #tpu.dot_dimension_numbers<[1], [0], [0], [1], [0, 0, 1, 1], [], []>} : vector<8x32xf32>, vector<32x32xf32>, vector<8x32xf32> -> vector<8x32xf32>
    %c0_22 = arith.constant 0 : index
    %c0_23 = arith.constant 0 : index
    %21 = vector.load %arg8[%c0_22, %c0_23] : memref<1x32xf32, #tpu.memory_space<vmem>>, vector<1x32xf32>
    %22 = vector.broadcast %21 : vector<1x32xf32> to vector<8x32xf32>
    %23 = arith.addf %20, %22 : vector<8x32xf32>
    %cst_24 = arith.constant 0.000000e+00 : f32
    %24 = vector.broadcast %cst_24 : f32 to vector<8x32xf32>
    %25 = arith.maximumf %23, %24 : vector<8x32xf32>
    %c0_25 = arith.constant 0 : index
    %c0_26 = arith.constant 0 : index
    %26 = vector.load %arg9[%c0_25, %c0_26] : memref<1x32xf32, #tpu.memory_space<vmem>>, vector<1x32xf32>
    %27 = vector.broadcast %26 : vector<1x32xf32> to vector<8x32xf32>
    %28 = arith.mulf %25, %27 : vector<8x32xf32>
    %cst_27 = arith.constant dense<0.000000e+00> : vector<8xf32>
    %29 = vector.multi_reduction <add>, %28, %cst_27 [1] : vector<8x32xf32> to vector<8xf32>
    %30 = vector.shape_cast %29 : vector<8xf32> to vector<8x1xf32>
    %c0_28 = arith.constant 0 : index
    %31 = memref.load %arg10[%c0_28] : memref<1xf32, #tpu.memory_space<smem>>
    %32 = vector.broadcast %31 : f32 to vector<8x1xf32>
    %33 = arith.addf %30, %32 : vector<8x1xf32>
    %c0_29 = arith.constant 0 : index
    %c0_30 = arith.constant 0 : index
    %34 = vector.load %arg11[%c0_29, %c0_30] : memref<8x1xf32, #tpu.memory_space<vmem>>, vector<8x1xf32>
    tpu.vector_store %arg11[%c0_29, %c0_30], %33 {strides = array<i32>} : memref<8x1xf32, #tpu.memory_space<vmem>>, vector<8x1xf32>,
    return
  }
  func.func @transform_0(%arg0: i32) -> (i32, i32) {
    %c0_i32 = arith.constant 0 : i32
    %c0_i32_0 = arith.constant 0 : i32
    return %arg0, %c0_i32 : i32, i32
  }
  func.func @transform_1(%arg0: i32) -> (i32, i32) {
    %c0_i32 = arith.constant 0 : i32
    %c0_i32_0 = arith.constant 0 : i32
    return %arg0, %c0_i32 : i32, i32
  }
  func.func @transform_2(%arg0: i32) -> (i32, i32) {
    %c0_i32 = arith.constant 0 : i32
    %c0_i32_0 = arith.constant 0 : i32
    %c0_i32_1 = arith.constant 0 : i32
    return %c0_i32, %c0_i32_0 : i32, i32
  }
  func.func @transform_3(%arg0: i32) -> (i32, i32) {
    %c0_i32 = arith.constant 0 : i32
    %c0_i32_0 = arith.constant 0 : i32
    %c0_i32_1 = arith.constant 0 : i32
    return %c0_i32, %c0_i32_0 : i32, i32
  }
  func.func @transform_4(%arg0: i32) -> (i32, i32) {
    %c0_i32 = arith.constant 0 : i32
    %c0_i32_0 = arith.constant 0 : i32
    %c0_i32_1 = arith.constant 0 : i32
    return %c0_i32, %c0_i32_0 : i32, i32
  }
  func.func @transform_5(%arg0: i32) -> (i32, i32) {
    %c0_i32 = arith.constant 0 : i32
    %c0_i32_0 = arith.constant 0 : i32
    %c0_i32_1 = arith.constant 0 : i32
    return %c0_i32, %c0_i32_0 : i32, i32
  }
  func.func @transform_6(%arg0: i32) -> (i32, i32) {
    %c0_i32 = arith.constant 0 : i32
    %c0_i32_0 = arith.constant 0 : i32
    %c0_i32_1 = arith.constant 0 : i32
    return %c0_i32, %c0_i32_0 : i32, i32
  }
  func.func @transform_7(%arg0: i32) -> (i32, i32) {
    %c0_i32 = arith.constant 0 : i32
    %c0_i32_0 = arith.constant 0 : i32
    %c0_i32_1 = arith.constant 0 : i32
    return %c0_i32, %c0_i32_0 : i32, i32
  }
  func.func @transform_8(%arg0: i32) -> (i32, i32) {
    %c0_i32 = arith.constant 0 : i32
    %c0_i32_0 = arith.constant 0 : i32
    %c0_i32_1 = arith.constant 0 : i32
    return %c0_i32, %c0_i32_0 : i32, i32
  }
  func.func @transform_9(%arg0: i32) -> i32 {
    %c0_i32 = arith.constant 0 : i32
    %c0_i32_0 = arith.constant 0 : i32
    return %c0_i32 : i32
  }
  func.func @transform_10(%arg0: i32) -> (i32, i32) {
    %c0_i32 = arith.constant 0 : i32
    %c0_i32_0 = arith.constant 0 : i32
    return %arg0, %c0_i32 : i32, i32
  }
}

</mosaic_0001>

<llo_original>
// kernel: critic_forward.1
$region0: #{critic_forward.1}
  #allocation0 [shape = 'u32[]', space=smem, size = 0x4, offset = 0x4, fixed_abs, tag = 'smem constant byte address 0x4 - core index']
  #allocation1 [shape = 'u32[144,128]{1,0:T(1,128)}', space=vmem, size = 0x12000, scoped, tag = 'internal scratch']
  #allocation2 [shape = 'f32[8,16]{1,0:T(8,128)}', space=vmem, size = 0x1000, scoped, tag = 'scratch operand']
  #allocation3 [shape = 'f32[1]{0:T(128)S(6)}', space=smem, size = 0x200, scoped, tag = 'scoped memory for critic_forward.1']
  %s0 = inlined_call_operand.vmem [shape: f32[8,12], index: 0, kind: input, shape index: {}]
  %s1 = inlined_call_operand.vmem [shape: f32[8,4], index: 1, kind: input, shape index: {}]
  %s2 = inlined_call_operand.hbm [shape: f32[16,32], index: 2, kind: input, shape index: {}]
  %s3 = inlined_call_operand.vmem [shape: f32[1,32], index: 3, kind: input, shape index: {}]
  %s4 = inlined_call_operand.vmem [shape: f32[32,32], index: 4, kind: input, shape index: {}]
  %s5 = inlined_call_operand.vmem [shape: f32[1,32], index: 5, kind: input, shape index: {}]
  %s6 = inlined_call_operand.hbm [shape: f32[32,32], index: 6, kind: input, shape index: {}]
  %s7 = inlined_call_operand.vmem [shape: f32[1,32], index: 7, kind: input, shape index: {}]
  %s8 = inlined_call_operand.vmem [shape: f32[1,32], index: 8, kind: input, shape index: {}]
  %s9 = inlined_call_operand.<no memory space> [shape: f32[1], index: 9, kind: input, shape index: {}]
  %s10 = inlined_call_operand.vmem [shape: f32[8,1], index: 10, kind: output, shape index: {}]
  %s11 = sld [smem:[#allocation0]]
  $region58: #{critic_forward.1} parent=0
    _
  %s13 = ssub.s32 1, %s11
  %s14 = scalar_select 0, %s13, %s11
  %15 = sst [smem:[#allocation3]] %s9
  $region1: #{critic_forward.1} parent=0
    #allocation4 [shape = 'u8[8192]{0}', space=vmem, size = 0x2000, scoped, tag = 'input window, operand 2, single buffered']
    #allocation5 [shape = 's32[1]{0}', space=sflag, size = 0x4, scoped, tag = 'scoped memory for critic_forward.1']
    #allocation6 [shape = 'u8[16384]{0}', space=vmem, size = 0x4000, scoped, tag = 'input window, operand 6, single buffered']
    #allocation7 [shape = 's32[1]{0}', space=sflag, size = 0x4, scoped, tag = 'scoped memory for critic_forward.1']
    %16 = vsyncpa [#allocation5], 0
    %17 = vsyncpa [#allocation7], 0
    // Predicated region
    $region2: #{critic_forward.1} parent=1 // pred_check
      _
    $region3: #{critic_forward.1} parent=1 // pred_check_branch
      %19 = sbr.rel (0) target = $region5
    $region4: #{critic_forward.1} parent=1 // pred_region
      _
    $region5: #{critic_forward.1} parent=1 // pred_fallthru
      _
    // Predicated region
    $region6: #{critic_forward.1} parent=1 // pred_check
      _
    $region7: #{critic_forward.1} parent=1 // pred_check_branch
      %21 = sbr.rel (0) target = $region9
    $region8: #{critic_forward.1} parent=1 // pred_region
      _
    $region9: #{critic_forward.1} parent=1 // pred_fallthru
      _
    // Predicated region
    $region10: #{critic_forward.1} parent=1 // pred_check
      _
    $region11: #{critic_forward.1} parent=1 // pred_check_branch
      %23 = sbr.rel (0) target = $region13
    $region12: #{critic_forward.1} parent=1 // pred_region
      %s25 = ssub.s32 256, 256
      %26 = vsyncadd [#allocation5], %s25
      %s27 = sshll.u32 [#allocation4], 4
      %s28 = int_to_ptr.vmem [resolvable:$true] %s27
      %33 = dma.hbm_to_vmem [thread:$0]  %s2, 256, %s28, [#allocation5], 128, 128, 8
    $region13: #{critic_forward.1} parent=1 // pred_fallthru
      _
    // Predicated region
    $region14: #{critic_forward.1} parent=1 // pred_check
      _
    $region15: #{critic_forward.1} parent=1 // pred_check_branch
      %35 = sbr.rel (0) target = $region17
    $region16: #{critic_forward.1} parent=1 // pred_region
      _
    $region17: #{critic_forward.1} parent=1 // pred_fallthru
      _
    // Predicated region
    $region18: #{critic_forward.1} parent=1 // pred_check
      _
    $region19: #{critic_forward.1} parent=1 // pred_check_branch
      %37 = sbr.rel (0) target = $region21
    $region20: #{critic_forward.1} parent=1 // pred_region
      _
    $region21: #{critic_forward.1} parent=1 // pred_fallthru
      _
    // Predicated region
    $region22: #{critic_forward.1} parent=1 // pred_check
      _
    $region23: #{critic_forward.1} parent=1 // pred_check_branch
      %39 = sbr.rel (0) target = $region25
    $region24: #{critic_forward.1} parent=1 // pred_region
      _
    $region25: #{critic_forward.1} parent=1 // pred_fallthru
      _
    // Predicated region
    $region26: #{critic_forward.1} parent=1 // pred_check
      _
    $region27: #{critic_forward.1} parent=1 // pred_check_branch
      %41 = sbr.rel (0) target = $region29
    $region28: #{critic_forward.1} parent=1 // pred_region
      %s43 = ssub.s32 512, 512
      %44 = vsyncadd [#allocation7], %s43
      %s45 = sshll.u32 [#allocation6], 4
      %s46 = int_to_ptr.vmem [resolvable:$true] %s45
      %51 = dma.hbm_to_vmem [thread:$0]  %s6, 512, %s46, [#allocation7], 128, 128, 8
    $region29: #{critic_forward.1} parent=1 // pred_fallthru
      _
    // Predicated region
    $region30: #{critic_forward.1} parent=1 // pred_check
      _
    $region31: #{critic_forward.1} parent=1 // pred_check_branch
      %53 = sbr.rel (0) target = $region33
    $region32: #{critic_forward.1} parent=1 // pred_region
      _
    $region33: #{critic_forward.1} parent=1 // pred_fallthru
      _
    // Predicated region
    $region34: #{critic_forward.1} parent=1 // pred_check
      _
    $region35: #{critic_forward.1} parent=1 // pred_check_branch
      %55 = sbr.rel (0) target = $region37
    $region36: #{critic_forward.1} parent=1 // pred_region
      _
    $region37: #{critic_forward.1} parent=1 // pred_fallthru
      _
    // Predicated region
    $region38: #{critic_forward.1} parent=1 // pred_check
      _
    $region39: #{critic_forward.1} parent=1 // pred_check_branch
      %57 = sbr.rel (0) target = $region41
    $region40: #{critic_forward.1} parent=1 // pred_region
      _
    $region41: #{critic_forward.1} parent=1 // pred_fallthru
      _
    // Predicated region
    $region42: #{critic_forward.1} parent=1 // pred_check
      _
    $region43: #{critic_forward.1} parent=1 // pred_check_branch
      %59 = sbr.rel (0) target = $region45
    $region44: #{critic_forward.1} parent=1 // pred_region
      %60 = dma.done [#allocation5], 256
    $region45: #{critic_forward.1} parent=1 // pred_fallthru
      _
    // Predicated region
    $region46: #{critic_forward.1} parent=1 // pred_check
      _
    $region47: #{critic_forward.1} parent=1 // pred_check_branch
      %62 = sbr.rel (0) target = $region49
    $region48: #{critic_forward.1} parent=1 // pred_region
      %63 = dma.done [#allocation7], 512
    $region49: #{critic_forward.1} parent=1 // pred_fallthru
      _
    %v64 = vld [vmem:[%s0] sm:$0xff]
    %vm65 = vcmask 97280
    %66 = vst.msk [vmem:[#allocation2] sm:$0xff] %vm65, %v64
    %v67 = vld [vmem:[%s1] sm:$0xff]
    %69 = vrot.lane.b32.xlu0 %v67, 12
    %v70 = vpop.permute.xlu0 %69
    %vm72 = vcmask 130144
    %73 = vst.msk [vmem:[#allocation2] sm:$0xff] %vm72, %v70
    %v74 = vld [vmem:[#allocation2] sm:$0xff]
    %v75 = vld [vmem:[#allocation4] sm:$0xff]
    %v76 = vld [vmem:[#allocation4 + $0x8] sm:$0xff]
    %v77 = vld [vmem:[%s3] sm:$0x1]
    %v79 = vlaneseq
    %v80 = vshrl.u32 %v79, 7
    %v81 = vsub.s32 0, %v80
    %v82 = vrot.slane %v77, %v81
    %vm84 = vcmask 130048
    %v86 = vsel %vm84, %v74, 0
    %88 = vmatprep.subr.mxu0 0.0
    %89 = vmatpush1.msra.mxu0 %v75
    %90 = vmatprep.subr.mxu0 0.0
    %91 = vmatpush1.msra.mxu0 %v76
    %92 = vmatprep.subr.mxu0 0.0
    %93 = vmatpush1.msra.mxu0 0.0
    %94 = vmatprep.subr.mxu0 0.0
    %95 = vmatpush1.msra.mxu0 0.0
    %96 = vmatprep.subr.mxu0 0.0
    %97 = vmatpush1.msra.mxu0 0.0
    %98 = vmatprep.subr.mxu0 0.0
    %99 = vmatpush1.msra.mxu0 0.0
    %100 = vmatprep.subr.mxu0 0.0
    %101 = vmatpush1.msra.mxu0 0.0
    %102 = vmatprep.subr.mxu0 0.0
    %103 = vmatpush1.msra.mxu0 0.0
    %104 = vmatprep.subr.mxu0 0.0
    %105 = vmatpush1.msra.mxu0 0.0
    %106 = vmatprep.subr.mxu0 0.0
    %107 = vmatpush1.msra.mxu0 0.0
    %108 = vmatprep.subr.mxu0 0.0
    %109 = vmatpush1.msra.mxu0 0.0
    %110 = vmatprep.subr.mxu0 0.0
    %111 = vmatpush1.msra.mxu0 0.0
    %112 = vmatprep.subr.mxu0 0.0
    %113 = vmatpush1.msra.mxu0 0.0
    %114 = vmatprep.subr.mxu0 0.0
    %115 = vmatpush1.msra.mxu0 0.0
    %116 = vmatprep.subr.mxu0 0.0
    %117 = vmatpush1.msra.mxu0 0.0
    %118 = vmatprep.subr.mxu0 0.0
    %119 = vmatpush1.msra.mxu0 0.0
    %120 = vmatprep.subr.mxu0 0.0
    %121 = vmatpush1.msra.mxu0 0.0
    %122 = vmatprep.subr.mxu0 0.0
    %123 = vmatpush1.msra.mxu0 0.0
    %124 = vmatprep.subr.mxu0 0.0
    %125 = vmatpush1.msra.mxu0 0.0
    %126 = vmatprep.subr.mxu0 0.0
    %127 = vmatpush1.msra.mxu0 0.0
    %128 = vmatprep.subr.mxu0 0.0
    %129 = vmatpush1.msra.mxu0 0.0
    %130 = vmatprep.subr.mxu0 0.0
    %131 = vmatpush1.msra.mxu0 0.0
    %132 = vmatprep.subr.mxu0 0.0
    %133 = vmatpush1.msra.mxu0 0.0
    %134 = vmatprep.subr.mxu0 0.0
    %135 = vmatpush1.msra.mxu0 0.0
    %136 = vmatprep.subr.mxu0 0.0
    %137 = vmatpush1.msra.mxu0 0.0
    %138 = vmatprep.subr.mxu0 0.0
    %139 = vmatpush1.msra.mxu0 0.0
    %140 = vmatprep.subr.mxu0 0.0
    %141 = vmatpush1.msra.mxu0 0.0
    %142 = vmatprep.subr.mxu0 0.0
    %143 = vmatpush1.msra.mxu0 0.0
    %144 = vmatprep.subr.mxu0 0.0
    %145 = vmatpush1.msra.mxu0 0.0
    %146 = vmatprep.subr.mxu0 0.0
    %147 = vmatpush1.msra.mxu0 0.0
    %148 = vmatprep.subr.mxu0 0.0
    %149 = vmatpush1.msra.mxu0 0.0
    %150 = vmatprep.subr.mxu0 0.0
    %151 = vmatpush1.msra.mxu0 0.0
    %152 = vmatprep.mubr.f32.mxu0 0.0
    %153 = vmatmul.mubr.f32.gmra.mrb[0].mxu0 %v86
    %v154 = vpop.f32.mrb[0].mxu0
    %v155 = vadd.f32 %v82, %v154
    %v156 = vpop.f32.mrb[0].mxu0
    %157 = vdwg.mxu0
    %v158 = vmax.f32 %v155, 0.0
    %v159 = vld [vmem:[%s4] sm:$0xff]
    %v160 = vld [vmem:[%s4 + $0x8] sm:$0xff]
    %v161 = vld [vmem:[%s4 + $0x10] sm:$0xff]
    %v162 = vld [vmem:[%s4 + $0x18] sm:$0xff]
    %v163 = vld [vmem:[%s5] sm:$0x1]
    %v165 = vlaneseq
    %v166 = vshrl.u32 %v165, 7
    %v167 = vsub.s32 0, %v166
    %v168 = vrot.slane %v163, %v167
    %vm170 = vcmask 261120
    %v172 = vsel %vm170, %v158, 0
    %174 = vmatprep.subr.mxu0 0.0
    %175 = vmatpush1.msra.mxu0 %v159
    %176 = vmatprep.subr.mxu0 0.0
    %177 = vmatpush1.msra.mxu0 %v160
    %178 = vmatprep.subr.mxu0 0.0
    %179 = vmatpush1.msra.mxu0 %v161
    %180 = vmatprep.subr.mxu0 0.0
    %181 = vmatpush1.msra.mxu0 %v162
    %182 = vmatprep.subr.mxu0 0.0
    %183 = vmatpush1.msra.mxu0 0.0
    %184 = vmatprep.subr.mxu0 0.0
    %185 = vmatpush1.msra.mxu0 0.0
    %186 = vmatprep.subr.mxu0 0.0
    %187 = vmatpush1.msra.mxu0 0.0
    %188 = vmatprep.subr.mxu0 0.0
    %189 = vmatpush1.msra.mxu0 0.0
    %190 = vmatprep.subr.mxu0 0.0
    %191 = vmatpush1.msra.mxu0 0.0
    %192 = vmatprep.subr.mxu0 0.0
    %193 = vmatpush1.msra.mxu0 0.0
    %194 = vmatprep.subr.mxu0 0.0
    %195 = vmatpush1.msra.mxu0 0.0
    %196 = vmatprep.subr.mxu0 0.0
    %197 = vmatpush1.msra.mxu0 0.0
    %198 = vmatprep.subr.mxu0 0.0
    %199 = vmatpush1.msra.mxu0 0.0
    %200 = vmatprep.subr.mxu0 0.0
    %201 = vmatpush1.msra.mxu0 0.0
    %202 = vmatprep.subr.mxu0 0.0
    %203 = vmatpush1.msra.mxu0 0.0
    %204 = vmatprep.subr.mxu0 0.0
    %205 = vmatpush1.msra.mxu0 0.0
    %206 = vmatprep.subr.mxu0 0.0
    %207 = vmatpush1.msra.mxu0 0.0
    %208 = vmatprep.subr.mxu0 0.0
    %209 = vmatpush1.msra.mxu0 0.0
    %210 = vmatprep.subr.mxu0 0.0
    %211 = vmatpush1.msra.mxu0 0.0
    %212 = vmatprep.subr.mxu0 0.0
    %213 = vmatpush1.msra.mxu0 0.0
    %214 = vmatprep.subr.mxu0 0.0
    %215 = vmatpush1.msra.mxu0 0.0
    %216 = vmatprep.subr.mxu0 0.0
    %217 = vmatpush1.msra.mxu0 0.0
    %218 = vmatprep.subr.mxu0 0.0
    %219 = vmatpush1.msra.mxu0 0.0
    %220 = vmatprep.subr.mxu0 0.0
    %221 = vmatpush1.msra.mxu0 0.0
    %222 = vmatprep.subr.mxu0 0.0
    %223 = vmatpush1.msra.mxu0 0.0
    %224 = vmatprep.subr.mxu0 0.0
    %225 = vmatpush1.msra.mxu0 0.0
    %226 = vmatprep.subr.mxu0 0.0
    %227 = vmatpush1.msra.mxu0 0.0
    %228 = vmatprep.subr.mxu0 0.0
    %229 = vmatpush1.msra.mxu0 0.0
    %230 = vmatprep.subr.mxu0 0.0
    %231 = vmatpush1.msra.mxu0 0.0
    %232 = vmatprep.subr.mxu0 0.0
    %233 = vmatpush1.msra.mxu0 0.0
    %234 = vmatprep.subr.mxu0 0.0
    %235 = vmatpush1.msra.mxu0 0.0
    %236 = vmatprep.subr.mxu0 0.0
    %237 = vmatpush1.msra.mxu0 0.0
    %238 = vmatprep.mubr.f32.mxu0 0.0
    %239 = vmatmul.mubr.f32.gmra.mrb[0].mxu0 %v172
    %v240 = vpop.f32.mrb[0].mxu0
    %v241 = vadd.f32 %v168, %v240
    %v242 = vpop.f32.mrb[0].mxu0
    %243 = vdwg.mxu0
    %v244 = vmax.f32 %v241, 0.0
    %v245 = vld [vmem:[#allocation6] sm:$0xff]
    %v246 = vld [vmem:[#allocation6 + $0x8] sm:$0xff]
    %v247 = vld [vmem:[#allocation6 + $0x10] sm:$0xff]
    %v248 = vld [vmem:[#allocation6 + $0x18] sm:$0xff]
    %v249 = vld [vmem:[%s7] sm:$0x1]
    %v251 = vlaneseq
    %v252 = vshrl.u32 %v251, 7
    %v253 = vsub.s32 0, %v252
    %v254 = vrot.slane %v249, %v253
    %v257 = vsel %vm170, %v244, 0
    %259 = vmatprep.subr.mxu0 0.0
    %260 = vmatpush1.msra.mxu0 %v245
    %261 = vmatprep.subr.mxu0 0.0
    %262 = vmatpush1.msra.mxu0 %v246
    %263 = vmatprep.subr.mxu0 0.0
    %264 = vmatpush1.msra.mxu0 %v247
    %265 = vmatprep.subr.mxu0 0.0
    %266 = vmatpush1.msra.mxu0 %v248
    %267 = vmatprep.subr.mxu0 0.0
    %268 = vmatpush1.msra.mxu0 0.0
    %269 = vmatprep.subr.mxu0 0.0
    %270 = vmatpush1.msra.mxu0 0.0
    %271 = vmatprep.subr.mxu0 0.0
    %272 = vmatpush1.msra.mxu0 0.0
    %273 = vmatprep.subr.mxu0 0.0
    %274 = vmatpush1.msra.mxu0 0.0
    %275 = vmatprep.subr.mxu0 0.0
    %276 = vmatpush1.msra.mxu0 0.0
    %277 = vmatprep.subr.mxu0 0.0
    %278 = vmatpush1.msra.mxu0 0.0
    %279 = vmatprep.subr.mxu0 0.0
    %280 = vmatpush1.msra.mxu0 0.0
    %281 = vmatprep.subr.mxu0 0.0
    %282 = vmatpush1.msra.mxu0 0.0
    %283 = vmatprep.subr.mxu0 0.0
    %284 = vmatpush1.msra.mxu0 0.0
    %285 = vmatprep.subr.mxu0 0.0
    %286 = vmatpush1.msra.mxu0 0.0
    %287 = vmatprep.subr.mxu0 0.0
    %288 = vmatpush1.msra.mxu0 0.0
    %289 = vmatprep.subr.mxu0 0.0
    %290 = vmatpush1.msra.mxu0 0.0
    %291 = vmatprep.subr.mxu0 0.0
    %292 = vmatpush1.msra.mxu0 0.0
    %293 = vmatprep.subr.mxu0 0.0
    %294 = vmatpush1.msra.mxu0 0.0
    %295 = vmatprep.subr.mxu0 0.0
    %296 = vmatpush1.msra.mxu0 0.0
    %297 = vmatprep.subr.mxu0 0.0
    %298 = vmatpush1.msra.mxu0 0.0
    %299 = vmatprep.subr.mxu0 0.0
    %300 = vmatpush1.msra.mxu0 0.0
    %301 = vmatprep.subr.mxu0 0.0
    %302 = vmatpush1.msra.mxu0 0.0
    %303 = vmatprep.subr.mxu0 0.0
    %304 = vmatpush1.msra.mxu0 0.0
    %305 = vmatprep.subr.mxu0 0.0
    %306 = vmatpush1.msra.mxu0 0.0
    %307 = vmatprep.subr.mxu0 0.0
    %308 = vmatpush1.msra.mxu0 0.0
    %309 = vmatprep.subr.mxu0 0.0
    %310 = vmatpush1.msra.mxu0 0.0
    %311 = vmatprep.subr.mxu0 0.0
    %312 = vmatpush1.msra.mxu0 0.0
    %313 = vmatprep.subr.mxu0 0.0
    %314 = vmatpush1.msra.mxu0 0.0
    %315 = vmatprep.subr.mxu0 0.0
    %316 = vmatpush1.msra.mxu0 0.0
    %317 = vmatprep.subr.mxu0 0.0
    %318 = vmatpush1.msra.mxu0 0.0
    %319 = vmatprep.subr.mxu0 0.0
    %320 = vmatpush1.msra.mxu0 0.0
    %321 = vmatprep.subr.mxu0 0.0
    %322 = vmatpush1.msra.mxu0 0.0
    %323 = vmatprep.mubr.f32.mxu0 0.0
    %324 = vmatmul.mubr.f32.gmra.mrb[0].mxu0 %v257
    %v325 = vpop.f32.mrb[0].mxu0
    %v326 = vadd.f32 %v254, %v325
    %v327 = vpop.f32.mrb[0].mxu0
    %328 = vdwg.mxu0
    %v329 = vmax.f32 %v326, 0.0
    %v330 = vld [vmem:[%s8] sm:$0x1]
    %v332 = vlaneseq
    %v333 = vshrl.u32 %v332, 7
    %v334 = vsub.s32 0, %v333
    %v335 = vrot.slane %v330, %v334
    %v337 = vmul.f32 %v329, %v335
    %v338 = vsel %vm170, %v337, 0.0
    %339 = vadd.xlane.f32.xlu0 %v338
    %v340 = vpop.xlane.xlu0 %339
    %s341 = sld [smem:[#allocation3]]
    %v342 = vstv %s341
    %v343 = vadd.f32 %v340, %v342
    %vm344 = vcmask 7168
    %345 = vst.msk [vmem:[%s10] sm:$0xff] %vm344, %v343
    // Predicated region
    $region50: #{critic_forward.1} parent=1 // pred_check
      _
    $region51: #{critic_forward.1} parent=1 // pred_check_branch
      %347 = sbr.rel (0) target = $region53
    $region52: #{critic_forward.1} parent=1 // pred_region
      _
    $region53: #{critic_forward.1} parent=1 // pred_fallthru
      _
    // Predicated region
    $region54: #{critic_forward.1} parent=1 // pred_check
      _
    $region55: #{critic_forward.1} parent=1 // pred_check_branch
      %349 = sbr.rel (0) target = $region57
    $region56: #{critic_forward.1} parent=1 // pred_region
      _
    $region57: #{critic_forward.1} parent=1 // pred_fallthru
      _
    %350 = vsyncpa [#allocation5], 1
    %351 = vsyncpa [#allocation7], 1

</llo_original>
